<compile_context>
chip_gen: v5e
topology: v5e:2x2
jax: 0.10.0
libtpu: 0.0.40
codegen_flags: <defaults>
</compile_context>

<pallas_src>
import jax
import jax.numpy as jnp
from jax.experimental import pallas as pl
from jax.experimental.pallas import tpu as pltpu


_DEFAULT_TOKEN_BLOCK = 256     # tokens per grid step on the resident paths
_PALLAS_MIN_TOKENS = 4096      # below this, jnp.take wins (fixed overhead)
_ONEHOT_MAX_VOCAB = 2048       # one-hot MXU gather only for small vocabs
_COPY_GROUP = 8                # rows per dense store in the exact copy path
_DMA_GROUP = 16                # rows gathered per grid step on the DMA path
_VMEM_RESERVE = 16 << 20       # headroom for Mosaic scratch / out buffers


def _round_up(x, m):
    return (x + m - 1) // m * m


def _vmem_capacity_bytes():
    try:
        info = pltpu.get_tpu_info()
        cap = getattr(info, "vmem_capacity_bytes", None)
        if cap:
            return int(cap)
    except Exception:
        pass
    # Per-generation fallback instead of a blanket 64 MiB.
    try:
        kind = jax.devices()[0].device_kind.lower()
    except Exception:
        kind = ""
    if "v7" in kind:
        return 64 * 1024 * 1024
    return 128 * 1024 * 1024       # v5e / v6e per-core VMEM


def _choose_token_block(n, token_block):
    """Pick T (multiple of 8); ensure >= 2 grid blocks so both v7x TCs work."""
    T = min(token_block, _round_up(n, 8))
    n_pad = _round_up(n, T)
    if n > 8 and n_pad // T < 2:
        T = max(8, _round_up((n + 1) // 2, 8))
    return T


# ---------------------------------------------------------------------------
# Path 1 (default, small vocab): VMEM-resident table, one-hot MXU gather.
# out[t, :] = sum_v [ids[t] == v] * table[v, :]   (one MXU matmul per block)
# ---------------------------------------------------------------------------
def _onehot_gather_kernel(ids_ref, emb_ref, out_ref):
    # ids_ref: (T, 1) int32 token ids for this block (VMEM)
    # emb_ref: (V, D) embedding table, VMEM-resident (constant index_map)
    # out_ref: (T, D) output tile
    T = out_ref.shape[0]
    V = emb_ref.shape[0]
    ids_col = ids_ref[...]                                     # (T, 1) int32
    vocab_row = jax.lax.broadcasted_iota(jnp.int32, (T, V), 1)  # (T, V)
    onehot = (ids_col == vocab_row).astype(emb_ref.dtype)       # (T, V)
    out = jnp.dot(onehot, emb_ref[...],
                  preferred_element_type=jnp.float32,
                  precision=jax.lax.Precision.HIGHEST)
    out_ref[...] = out.astype(out_ref.dtype)


def _gather_onehot(ids, emb, T, vmem_limit):
    n = ids.shape[0]
    V, Dp = emb.shape
    n_pad = _round_up(n, T)
    ids_pad = jnp.pad(ids, (0, n_pad - n)).reshape(n_pad, 1)   # pad with id 0

    out = pl.pallas_call(
        _onehot_gather_kernel,
        out_shape=jax.ShapeDtypeStruct((n_pad, Dp), emb.dtype),
        grid=(n_pad // T,),
        in_specs=[
            pl.BlockSpec((T, 1), lambda i: (i, 0)),            # per-block ids
            pl.BlockSpec((V, Dp), lambda i: (0, 0)),           # resident table
        ],
        out_specs=pl.BlockSpec((T, Dp), lambda i: (i, 0)),
        compiler_params=pltpu.CompilerParams(
            dimension_semantics=("parallel",),
            vmem_limit_bytes=vmem_limit),
    )(ids_pad, emb)
    return out[:n]


# ---------------------------------------------------------------------------
# Path 2 (resident, bigger vocab): exact copy gather, 8 rows per dense store.
# ---------------------------------------------------------------------------
def _copy_gather_kernel(ids_ref, emb_ref, out_ref):
    # ids_ref: (n_pad,) int32 in SMEM (scalar-prefetched)
    # emb_ref: (V, D) table, VMEM-resident
    # out_ref: (T, D) output tile
    T = out_ref.shape[0]
    base = pl.program_id(0) * T

    @pl.loop(0, T // _COPY_GROUP)
    def _(g):
        start = pl.multiple_of(g * _COPY_GROUP, _COPY_GROUP)
        rows = [emb_ref[pl.ds(ids_ref[base + start + u], 1), :]
                for u in range(_COPY_GROUP)]
        # 8 independent dynamic-row loads -> one (8, D) lane/sublane-dense store
        out_ref[pl.ds(start, _COPY_GROUP), :] = jnp.concatenate(rows, axis=0)


def _gather_copy(ids, emb, T, vmem_limit):
    n = ids.shape[0]
    V, Dp = emb.shape
    n_pad = _round_up(n, T)
    ids_pad = jnp.pad(ids, (0, n_pad - n))

    out = pl.pallas_call(
        _copy_gather_kernel,
        out_shape=jax.ShapeDtypeStruct((n_pad, Dp), emb.dtype),
        grid_spec=pltpu.PrefetchScalarGridSpec(
            num_scalar_prefetch=1,                             # ids -> SMEM
            grid=(n_pad // T,),
            in_specs=[pl.BlockSpec((V, Dp), lambda i, ids_s: (0, 0))],
            out_specs=pl.BlockSpec((T, Dp), lambda i, ids_s: (i, 0)),
        ),
        compiler_params=pltpu.CompilerParams(
            dimension_semantics=("parallel",),
            vmem_limit_bytes=vmem_limit),
    )(ids_pad, emb)
    return out[:n]


# ---------------------------------------------------------------------------
# Path 3 (huge vocab): batched manual row-DMA gather, G rows per grid step.
# ---------------------------------------------------------------------------
def _dma_gather_kernel(ids_ref, emb_hbm, out_ref, buf, sems):
    # ids_ref: (n_pad,) int32 in SMEM (scalar-prefetched)
    # emb_hbm: (V, D) table left in HBM (memory_space=pl.ANY)
    # out_ref: (G, D) output block;  buf: (G, D) VMEM scratch;  sems: (G,) DMA
    G = out_ref.shape[0]
    base = pl.program_id(0) * G
    # Launch all G row DMAs before waiting so they overlap each other.
    for g in range(G):
        row = ids_ref[base + g]
        pltpu.make_async_copy(emb_hbm.at[pl.ds(row, 1), :],
                              buf.at[pl.ds(g, 1), :],
                              sems.at[g]).start()
    for g in range(G):
        pltpu.make_async_copy(emb_hbm.at[pl.ds(0, 1), :],
                              buf.at[pl.ds(g, 1), :],
                              sems.at[g]).wait()
    out_ref[...] = buf[...]                                    # dense (G, D)


def _gather_row_dma(ids, emb):
    n = ids.shape[0]
    V, Dp = emb.shape
    G = _DMA_GROUP
    n_pad = _round_up(n, G)
    ids_pad = jnp.pad(ids, (0, n_pad - n))

    out = pl.pallas_call(
        _dma_gather_kernel,
        out_shape=jax.ShapeDtypeStruct((n_pad, Dp), emb.dtype),
        grid_spec=pltpu.PrefetchScalarGridSpec(
            num_scalar_prefetch=1,
            grid=(n_pad // G,),
            in_specs=[pl.BlockSpec(memory_space=pl.ANY)],      # table stays HBM
            out_specs=pl.BlockSpec((G, Dp), lambda i, ids_s: (i, 0)),
            scratch_shapes=[pltpu.VMEM((G, Dp), emb.dtype),
                            pltpu.SemaphoreType.DMA((G,))],
        ),
        compiler_params=pltpu.CompilerParams(
            dimension_semantics=("parallel",)),
    )(ids_pad, emb)
    return out[:n]


# ---------------------------------------------------------------------------
# Forward wrapper (matches PyTorch WORDEBD.forward semantics).
# ---------------------------------------------------------------------------
def wordebd_forward(data, emb_weight, *, use_pallas=None,
                    token_block=_DEFAULT_TOKEN_BLOCK, gather_mode="auto"):
    """Embedding lookup: data (B, S) int -> (B, S, D) float."""
    B, S = data.shape
    V, D = emb_weight.shape
    n = B * S

    if use_pallas is None:
        use_pallas = n >= _PALLAS_MIN_TOKENS
    if not use_pallas:
        # Tiny workloads: XLA's native gather beats pallas_call fixed costs.
        return jnp.take(emb_weight, data.astype(jnp.int32), axis=0)

    # Clamp ids (same behavior as jnp.take) so bad ids never become OOB DMAs.
    ids = jnp.clip(data.reshape(-1).astype(jnp.int32), 0, V - 1)

    # Lane-dense last dim: pad D to a multiple of 128, slice after the kernel.
    Dp = _round_up(D, 128)
    emb_p = emb_weight if Dp == D else jnp.pad(emb_weight, ((0, 0), (0, Dp - D)))

    itemsize = jnp.dtype(emb_weight.dtype).itemsize
    cap = _vmem_capacity_bytes()
    usable = cap - _VMEM_RESERVE
    vmem_limit = int(max(32 << 20, usable))

    T = _choose_token_block(n, token_block)

    # Consistent VMEM budget: double-buffered table + double-buffered out tile
    # (+ one-hot working set for the MXU path) + slack.
    table_bytes = 2 * V * Dp * itemsize
    out_bytes = 2 * T * Dp * itemsize
    onehot_bytes = 2 * T * V * 4
    resident_fits = table_bytes + out_bytes + (2 << 20) <= usable
    onehot_ok = (resident_fits and V <= _ONEHOT_MAX_VOCAB and
                 table_bytes + out_bytes + onehot_bytes + (2 << 20) <= usable)

    if gather_mode == "auto":
        mode = "onehot" if onehot_ok else ("copy" if resident_fits else "dma")
    else:
        mode = gather_mode

    if mode == "onehot":
        out_flat = _gather_onehot(ids, emb_p, T, vmem_limit)
    elif mode == "copy":
        out_flat = _gather_copy(ids, emb_p, T, vmem_limit)
    else:
        out_flat = _gather_row_dma(ids, emb_p)

    if Dp != D:
        out_flat = out_flat[:, :D]
    return out_flat.reshape(B, S, D)


class WORDEBD:
    """JAX/Pallas port of the PyTorch WORDEBD module (fixed word embeddings)."""

    def __init__(self, vocab_vectors, finetune_ebd):
        self.vocab_size, self.embedding_dim = vocab_vectors.shape
        # requires_grad is a training-time concern; forward is identical.
        self.weight = vocab_vectors
        self.finetune_ebd = finetune_ebd

    def __call__(self, data, weights=None, **kwargs):
        if weights is None or not self.finetune_ebd:
            return wordebd_forward(data, self.weight, **kwargs)
        return wordebd_forward(
            data, weights["ebd.embedding_layer.weight"], **kwargs)


if __name__ == "__main__":
    key = jax.random.PRNGKey(0)
    k_vec, k_ids, k_w, k_vec2, k_ids2 = jax.random.split(key, 5)

    vocab_size = 64
    embedding_dim = 128
    batch_size = 2
    max_text_len = 8

    vocab_vectors = jax.random.normal(
        k_vec, (vocab_size, embedding_dim), dtype=jnp.float32)
    data = jax.random.randint(
        k_ids, (batch_size, max_text_len), 0, vocab_size, dtype=jnp.int32)
    ref = jnp.take(vocab_vectors, data, axis=0)

    ebd = WORDEBD(vocab_vectors, finetune_ebd=False)

    # 1) default resident path: one-hot MXU gather (HIGHEST precision).
    out = jax.block_until_ready(ebd(data, use_pallas=True))
    assert out.shape == (batch_size, max_text_len, embedding_dim)
    assert out.dtype == jnp.float32
    assert jnp.allclose(out, ref, rtol=1e-5, atol=1e-5)

    # 2) exact resident fallback: grouped 8-row copy gather (bit-exact).
    out2 = jax.block_until_ready(ebd(data, use_pallas=True, gather_mode="copy"))
    assert jnp.array_equal(out2, ref)

    # 3) large-vocab path: batched manual row-DMA gather (bit-exact).
    out3 = jax.block_until_ready(ebd(data, use_pallas=True, gather_mode="dma"))
    assert jnp.array_equal(out3, ref)

    # 4) finetune_ebd=True with externally supplied weights.
    alt_weight = jax.random.normal(
        k_w, (vocab_size, embedding_dim), dtype=jnp.float32)
    ebd_ft = WORDEBD(vocab_vectors, finetune_ebd=True)
    out4 = jax.block_until_ready(
        ebd_ft(data, weights={"ebd.embedding_layer.weight": alt_weight},
               use_pallas=True, gather_mode="copy"))
    assert jnp.array_equal(out4, jnp.take(alt_weight, data, axis=0))

    # 5) non-128-multiple embedding dim exercises the pad-to-lane-dense path.
    vocab_small = jax.random.normal(k_vec2, (32, 72), dtype=jnp.float32)
    data_small = jax.random.randint(k_ids2, (2, 8), 0, 32, dtype=jnp.int32)
    out5 = jax.block_until_ready(
        wordebd_forward(data_small, vocab_small, use_pallas=True))
    assert out5.shape == (2, 8, 72)
    assert jnp.allclose(out5, jnp.take(vocab_small, data_small, axis=0),
                        rtol=1e-5, atol=1e-5)

    # 6) auto dispatch: tiny inputs skip Pallas (jnp.take fast path).
    out6 = jax.block_until_ready(ebd(data))
    assert jnp.array_equal(out6, ref)

    print("KERNEL_OK")
</pallas_src>

<mosaic_0001>
module attributes {stable_mosaic.version = 11 : i64} {
  func.func @_onehot_gather_kernel(%arg0: i32, %arg1: memref<8x1xi32, #tpu.memory_space<vmem>>, %arg2: memref<64x128xf32, #tpu.memory_space<vmem>>, %arg3: memref<8x128xf32, #tpu.memory_space<vmem>>) attributes {dimension_semantics = [#tpu.dimension_semantics<parallel>], iteration_bounds = array<i64: 2>, scalar_prefetch = 0 : i64, scratch_operands = 0 : i64, tpu.core_type = #tpu.core_type<tc>, window_params = [{transform_indices = @transform_0, window_bounds = array<i64: 8, 1>}, {pipeline_mode = #tpu.pipeline_mode<synchronous>, transform_indices = @transform_1, window_bounds = array<i64: 64, 128>}, {transform_indices = @transform_2, window_bounds = array<i64: 8, 128>}]} {
    %c0 = arith.constant 0 : index
    %c0_0 = arith.constant 0 : index
    %0 = vector.load %arg1[%c0, %c0_0] : memref<8x1xi32, #tpu.memory_space<vmem>>, vector<8x1xi32>
    %1 = tpu.iota {dimensions = array<i32: 1>} : vector<8x64xi32>
    %2 = vector.broadcast %0 : vector<8x1xi32> to vector<8x64xi32>
    %3 = arith.cmpi eq, %2, %1 : vector<8x64xi32>
    %4 = arith.extui %3 : vector<8x64xi1> to vector<8x64xi32>
    %5 = arith.sitofp %4 : vector<8x64xi32> to vector<8x64xf32>
    %c0_1 = arith.constant 0 : index
    %c0_2 = arith.constant 0 : index
    %6 = vector.load %arg2[%c0_1, %c0_2] : memref<64x128xf32, #tpu.memory_space<vmem>>, vector<64x128xf32>
    %cst = arith.constant dense<0.000000e+00> : vector<8x128xf32>
    %7 = tpu.matmul %5, %6, %cst {dimension_numbers = #tpu.dot_dimension_numbers<[1], [0], [0], [1], [0, 0, 1, 1], [], []>, precision = #tpu.contract_precision<fp32>} : vector<8x64xf32>, vector<64x128xf32>, vector<8x128xf32> -> vector<8x128xf32>
    %c0_3 = arith.constant 0 : index
    %c0_4 = arith.constant 0 : index
    %8 = vector.load %arg3[%c0_3, %c0_4] : memref<8x128xf32, #tpu.memory_space<vmem>>, vector<8x128xf32>
    tpu.vector_store %arg3[%c0_3, %c0_4], %7 {strides = array<i32>} : memref<8x128xf32, #tpu.memory_space<vmem>>, vector<8x128xf32>,
    return
  }
  func.func @transform_0(%arg0: i32) -> (i32, i32) {
    %c0_i32 = arith.constant 0 : i32
    %c0_i32_0 = arith.constant 0 : i32
    return %arg0, %c0_i32 : i32, i32
  }
  func.func @transform_1(%arg0: i32) -> (i32, i32) {
    %c0_i32 = arith.constant 0 : i32
    %c0_i32_0 = arith.constant 0 : i32
    %c0_i32_1 = arith.constant 0 : i32
    return %c0_i32, %c0_i32_0 : i32, i32
  }
  func.func @transform_2(%arg0: i32) -> (i32, i32) {
    %c0_i32 = arith.constant 0 : i32
    %c0_i32_0 = arith.constant 0 : i32
    return %arg0, %c0_i32 : i32, i32
  }
}

</mosaic_0001>

<llo_original>
// kernel: tpu_custom_call.1
$region0: #{tpu_custom_call.1}
  #allocation0 [shape = 'u32[]', space=smem, size = 0x4, offset = 0x4, fixed_abs, tag = 'smem constant byte address 0x4 - core index']
  #allocation1 [shape = 'u32[72,128]{1,0:T(1,128)}', space=vmem, size = 0x9000, scoped, tag = 'internal scratch']
  %s0 = inlined_call_operand.vmem [shape: s32[16,1], index: 0, kind: input, shape index: {}]
  %s1 = inlined_call_operand.hbm [shape: f32[64,128], index: 1, kind: input, shape index: {}]
  %s2 = inlined_call_operand.hbm [shape: f32[16,128], index: 2, kind: output, shape index: {}]
  %s3 = sld [smem:[#allocation0]]
  $region45: #{tpu_custom_call.1} parent=0
    _
  %s5 = ssub.s32 1, %s3
  %s6 = scalar_select 0, %s5, %s3
  $region1: #{tpu_custom_call.1} parent=0
    #allocation2 [shape = 'u8[32768]{0}', space=vmem, size = 0x8000, scoped, tag = 'input window, operand 1, single buffered']
    #allocation3 [shape = 's32[2]{0}', space=sflag, size = 0x8, scoped, tag = 'scoped memory for tpu_custom_call.1']
    #allocation4 [shape = 's32[2]{0}', space=sflag, size = 0x8, scoped, tag = 'scoped memory for tpu_custom_call.1']
    #allocation5 [shape = 'u8[8192]{0}', space=vmem, size = 0x2000, scoped, tag = 'output window, operand 0']
    %7 = vsyncpa [#allocation3], 0
    %8 = vsyncpa [#allocation4], 0
    %s9 = scalar_lea.sflag [#allocation4], 1
    %10 = vsyncpa %s9, 0
    loop: start=0, step=1, limit=4
    $region2: #{tpu_custom_call.1} parent=1 // loop_pre_header
      _
    $region3: #{tpu_custom_call.1} parent=1 // loop_header
      %s12 = sphi 0, %s16
      %p13 = scmp.ge.s32.totalorder %s12, 4
      %s22 = sphi 0, %s24
      %s25 = sphi 0, %s22
      %s26 = sphi 0, %s25
      %s42 = sphi 0, %s26
      %s46 = sphi 0, %s46
      %s48 = sphi 0, %s46
      %s49 = sphi 0, %s48
      %s63 = sphi 0, %s49
      %s69 = sphi 0, %s71
      %s72 = sphi 0, %s69
      %s73 = sphi 0, %s72
      %s89 = sphi 0, %s73
    $region4: #{tpu_custom_call.1} parent=1 // loop_header_branch
      %15 = sbr.rel (%p13) target = $region8
    $region5: #{tpu_custom_call.1} parent=1 // loop_body
      %s17 = ssub.s32 %s12, 1
      %s18 = ssub.s32 %s12, 2
      %s19 = sadd.s32 %s12, 1
      %s20 = ssub.s32 %s12, %s19
      %p21 = scmp.eq.s32.totalorder %s20, 0
      %s23 = sadd.s32 %s22, 1
      %s24 = scalar_select %p21, %s22, %s23
      %p27 = pneg %p21
      %p28 = scmp.eq.s32.totalorder %s12, 1
      %p29 = por %p27, %p28
      %p30 = scmp.ne.s32.totalorder %s22, %s25
      %p31 = scmp.eq.s32.totalorder %s12, 0
      %p32 = por %p30, %p31
      %p33 = scmp.ne.s32.totalorder %s22, %s25
      %p34 = scmp.eq.s32.totalorder %s17, 1
      %p35 = por %p33, %p34
      %p36 = scmp.ne.s32.totalorder %s25, %s26
      %p37 = scmp.eq.s32.totalorder %s17, 0
      %p38 = por %p36, %p37
      %p39 = scmp.ne.s32.totalorder %s25, %s26
      %p40 = scmp.eq.s32.totalorder %s18, 1
      %p41 = por %p39, %p40
      %p43 = scmp.ne.s32.totalorder %s26, %s42
      %p44 = scmp.eq.s32.totalorder %s18, 0
      %p45 = por %p43, %p44
      %s47 = sadd.s32 %s46, 1
      %p50 = scmp.eq.s32.totalorder %s12, 1
      %p51 = scmp.ne.s32.totalorder %s46, %s48
      %p52 = scmp.eq.s32.totalorder %s12, 0
      %p53 = por %p51, %p52
      %p54 = scmp.ne.s32.totalorder %s46, %s48
      %p55 = scmp.eq.s32.totalorder %s17, 1
      %p56 = por %p54, %p55
      %p57 = scmp.ne.s32.totalorder %s48, %s49
      %p58 = scmp.eq.s32.totalorder %s17, 0
      %p59 = por %p57, %p58
      %p60 = scmp.ne.s32.totalorder %s48, %s49
      %p61 = scmp.eq.s32.totalorder %s18, 1
      %p62 = por %p60, %p61
      %p64 = scmp.ne.s32.totalorder %s49, %s63
      %p65 = scmp.eq.s32.totalorder %s18, 0
      %p66 = por %p64, %p65
      %s67 = ssub.s32 %s12, %s19
      %p68 = scmp.eq.s32.totalorder %s67, 0
      %s70 = sadd.s32 %s69, 1
      %s71 = scalar_select %p68, %s69, %s70
      %p74 = pneg %p68
      %p75 = scmp.eq.s32.totalorder %s12, 1
      %p76 = por %p74, %p75
      %p77 = scmp.ne.s32.totalorder %s69, %s72
      %p78 = scmp.eq.s32.totalorder %s12, 0
      %p79 = por %p77, %p78
      %p80 = scmp.ne.s32.totalorder %s69, %s72
      %p81 = scmp.eq.s32.totalorder %s17, 1
      %p82 = por %p80, %p81
      %p83 = scmp.ne.s32.totalorder %s72, %s73
      %p84 = scmp.eq.s32.totalorder %s17, 0
      %p85 = por %p83, %p84
      %p86 = scmp.ne.s32.totalorder %s72, %s73
      %p87 = scmp.eq.s32.totalorder %s18, 1
      %p88 = por %p86, %p87
      %p90 = scmp.ne.s32.totalorder %s73, %s89
      %p91 = scmp.eq.s32.totalorder %s18, 0
      %p92 = por %p90, %p91
      %p93 = scmp.le.s32.totalorder 1, %s12
      %p94 = scmp.lt.s32.totalorder %s12, 3
      %p95 = pnand %p93, %p94
      %p96 = pneg %p95
      // Predicated region
      $region9: #{tpu_custom_call.1} parent=5 // pred_check
        _
      $region10: #{tpu_custom_call.1} parent=5 // pred_check_branch
        %98 = sbr.rel (%p95) target = $region12
      $region11: #{tpu_custom_call.1} parent=5 // pred_region
        %s99 = ssub.s32 %s12, 1
        // Predicated region
        $region13: #{tpu_custom_call.1} parent=11 // pred_check
          %p100 = pneg %p59
        $region14: #{tpu_custom_call.1} parent=11 // pred_check_branch
          %102 = sbr.rel (%p100) target = $region16
        $region15: #{tpu_custom_call.1} parent=11 // pred_region
          %104 = vsyncadd [#allocation3], 0
          %s105 = sshll.u32 %s1, 4
          %s106 = int_to_ptr.hbm [resolvable:$true] %s105
          %s107 = sshll.u32 [#allocation2], 4
          %s108 = int_to_ptr.vmem [resolvable:$true] %s107
          %113 = dma.hbm_to_vmem [thread:$0]  %s106, 1024, %s108, [#allocation3], 128, 128, 8
        $region16: #{tpu_custom_call.1} parent=11 // pred_fallthru
          _
      $region12: #{tpu_custom_call.1} parent=5 // pred_fallthru
        _
      %p114 = scmp.lt.s32.totalorder %s12, 2
      // Predicated region
      $region17: #{tpu_custom_call.1} parent=5 // pred_check
        %p115 = pneg %p114
      $region18: #{tpu_custom_call.1} parent=5 // pred_check_branch
        %117 = sbr.rel (%p115) target = $region20
      $region19: #{tpu_custom_call.1} parent=5 // pred_region
        // Predicated region
        $region21: #{tpu_custom_call.1} parent=19 // pred_check
          %p118 = pneg %p32
        $region22: #{tpu_custom_call.1} parent=19 // pred_check_branch
          %120 = sbr.rel (%p118) target = $region24
        $region23: #{tpu_custom_call.1} parent=19 // pred_region
          %p121 = scmp.lt.s32.totalorder %s12, 1
          %s122 = scalar_select %p121, %s12, 1
          %s123 = smul.addr %s122, 8
          %s124 = scalar_lea.vmem %s0, %s123
        $region24: #{tpu_custom_call.1} parent=19 // pred_fallthru
          _
      $region20: #{tpu_custom_call.1} parent=5 // pred_fallthru
        _
      %p125 = scmp.le.s32.totalorder 1, %s12
      %p126 = scmp.lt.s32.totalorder %s12, 3
      %p127 = pnand %p125, %p126
      %p128 = pneg %p127
      // Predicated region
      $region25: #{tpu_custom_call.1} parent=5 // pred_check
        _
      $region26: #{tpu_custom_call.1} parent=5 // pred_check_branch
        %130 = sbr.rel (%p127) target = $region28
      $region27: #{tpu_custom_call.1} parent=5 // pred_region
        %s131 = ssub.s32 %s12, 1
        // Predicated region
        $region29: #{tpu_custom_call.1} parent=27 // pred_check
          %p132 = pneg %p59
        $region30: #{tpu_custom_call.1} parent=27 // pred_check_branch
          %134 = sbr.rel (%p132) target = $region32
        $region31: #{tpu_custom_call.1} parent=27 // pred_region
          %136 = dma.done [#allocation3], 1024
        $region32: #{tpu_custom_call.1} parent=27 // pred_fallthru
          _
        %p137 = scmp.lt.s32.totalorder %s17, 1
        %s138 = scalar_select %p137, %s17, 1
        %s139 = smul.addr %s138, 8
        %s140 = scalar_lea.vmem %s0, %s139
        %p141 = pneg %p38
        %p142 = pneg %p35
        %p143 = pneg %p59
        %p144 = pneg %p56
        %p145 = pneg %p85
        %p146 = pneg %p82
        %s147 = sand.u32 %s72, 1
        %s148 = scalar_lea.sflag [#allocation4], %s147
        %s149 = sand.u32 %s72, 1
        %s150 = smul.addr %s149, 8
        %s151 = scalar_lea.vmem [#allocation5], %s150
        %p152 = scmp.lt.s32.totalorder %s17, 1
        %s153 = scalar_select %p152, %s17, 1
        %s154 = smul.addr %s153, 8
        %s155 = scalar_lea.vmem %s0, %s154
        %v156 = vld [vmem:[%s155] sm:$0xff]
        %v157 = vlaneseq
        %v158 = vand.u32 %v157, 127
        %159 = vset.pattern.permute.xlu0 0
        %160 = vperm.xlu0 %159, %v156
        %v161 = vpop.permute.xlu0 %160
        %vm162 = vcmp.eq.s32.totalorder %v161, %v158
        %v163 = vsel %vm162, 1, 0
        %v164 = vcvt.s32.f32 %v163
        %v165 = vld [vmem:[#allocation2] sm:$0xff]
        %v166 = vld [vmem:[#allocation2 + $0x8] sm:$0xff]
        %v167 = vld [vmem:[#allocation2 + $0x10] sm:$0xff]
        %v168 = vld [vmem:[#allocation2 + $0x18] sm:$0xff]
        %v169 = vld [vmem:[#allocation2 + $0x20] sm:$0xff]
        %v170 = vld [vmem:[#allocation2 + $0x28] sm:$0xff]
        %v171 = vld [vmem:[#allocation2 + $0x30] sm:$0xff]
        %v172 = vld [vmem:[#allocation2 + $0x38] sm:$0xff]
        %vm173 = vcmask 523264
        %v175 = vsel %vm173, %v164, 0
        %177 = vmatpush.msra.mxu0 0.0
        %178 = vmatpush.msra.mxu0 0.0
        %179 = vmatpush.msra.mxu0 0.0
        %180 = vmatpush.msra.mxu0 0.0
        %181 = vmatpush.msra.mxu0 0.0
        %182 = vmatpush.msra.mxu0 0.0
        %183 = vmatpush.msra.mxu0 0.0
        %184 = vmatpush.msra.mxu0 0.0
        %v185 = vand.u32 %v172, 4294901760
        %186 = vmatpush.msra.mxu0 %v185
        %v187 = vand.u32 %v171, 4294901760
        %188 = vmatpush.msra.mxu0 %v187
        %v189 = vand.u32 %v170, 4294901760
        %190 = vmatpush.msra.mxu0 %v189
        %v191 = vand.u32 %v169, 4294901760
        %192 = vmatpush.msra.mxu0 %v191
        %v193 = vand.u32 %v168, 4294901760
        %194 = vmatpush.msra.mxu0 %v193
        %v195 = vand.u32 %v167, 4294901760
        %196 = vmatpush.msra.mxu0 %v195
        %v197 = vand.u32 %v166, 4294901760
        %198 = vmatpush.msra.mxu0 %v197
        %v199 = vand.u32 %v165, 4294901760
        %200 = vmatpush.msra.mxu0 %v199
        %v201 = vand.u32 %v175, 4294901760
        %v202 = vsub.f32 %v175, %v201
        %v203 = vand.u32 %v202, 4294901760
        %v204 = vsub.f32 %v202, %v203
        %v205 = vand.u32 %v204, 4294901760
        %206 = vmatmul.f32.gmra.mxu0 %v205
        %v207 = vpop.f32.mrf.mxu0
        %v208 = vadd.f32 0.0, %v207
        %209 = vdwg.mxu0
        %210 = vmatpush.msra.mxu0 0.0
        %211 = vmatpush.msra.mxu0 0.0
        %212 = vmatpush.msra.mxu0 0.0
        %213 = vmatpush.msra.mxu0 0.0
        %214 = vmatpush.msra.mxu0 0.0
        %215 = vmatpush.msra.mxu0 0.0
        %216 = vmatpush.msra.mxu0 0.0
        %217 = vmatpush.msra.mxu0 0.0
        %v218 = vand.u32 %v172, 4294901760
        %v219 = vsub.f32 %v172, %v218
        %v220 = vand.u32 %v219, 4294901760
        %v221 = vsub.f32 %v219, %v220
        %v222 = vand.u32 %v221, 4294901760
        %223 = vmatpush.msra.mxu0 %v222
        %v224 = vand.u32 %v171, 4294901760
        %v225 = vsub.f32 %v171, %v224
        %v226 = vand.u32 %v225, 4294901760
        %v227 = vsub.f32 %v225, %v226
        %v228 = vand.u32 %v227, 4294901760
        %229 = vmatpush.msra.mxu0 %v228
        %v230 = vand.u32 %v170, 4294901760
        %v231 = vsub.f32 %v170, %v230
        %v232 = vand.u32 %v231, 4294901760
        %v233 = vsub.f32 %v231, %v232
        %v234 = vand.u32 %v233, 4294901760
        %235 = vmatpush.msra.mxu0 %v234
        %v236 = vand.u32 %v169, 4294901760
        %v237 = vsub.f32 %v169, %v236
        %v238 = vand.u32 %v237, 4294901760
        %v239 = vsub.f32 %v237, %v238
        %v240 = vand.u32 %v239, 4294901760
        %241 = vmatpush.msra.mxu0 %v240
        %v242 = vand.u32 %v168, 4294901760
        %v243 = vsub.f32 %v168, %v242
        %v244 = vand.u32 %v243, 4294901760
        %v245 = vsub.f32 %v243, %v244
        %v246 = vand.u32 %v245, 4294901760
        %247 = vmatpush.msra.mxu0 %v246
        %v248 = vand.u32 %v167, 4294901760
        %v249 = vsub.f32 %v167, %v248
        %v250 = vand.u32 %v249, 4294901760
        %v251 = vsub.f32 %v249, %v250
        %v252 = vand.u32 %v251, 4294901760
        %253 = vmatpush.msra.mxu0 %v252
        %v254 = vand.u32 %v166, 4294901760
        %v255 = vsub.f32 %v166, %v254
        %v256 = vand.u32 %v255, 4294901760
        %v257 = vsub.f32 %v255, %v256
        %v258 = vand.u32 %v257, 4294901760
        %259 = vmatpush.msra.mxu0 %v258
        %v260 = vand.u32 %v165, 4294901760
        %v261 = vsub.f32 %v165, %v260
        %v262 = vand.u32 %v261, 4294901760
        %v263 = vsub.f32 %v261, %v262
        %v264 = vand.u32 %v263, 4294901760
        %265 = vmatpush.msra.mxu0 %v264
        %v266 = vand.u32 %v175, 4294901760
        %267 = vmatmul.f32.gmra.mxu0 %v266
        %v268 = vpop.f32.mrf.mxu0
        %v269 = vadd.f32 %v208, %v268
        %270 = vdwg.mxu0
        %271 = vmatpush.msra.mxu0 0.0
        %272 = vmatpush.msra.mxu0 0.0
        %273 = vmatpush.msra.mxu0 0.0
        %274 = vmatpush.msra.mxu0 0.0
        %275 = vmatpush.msra.mxu0 0.0
        %276 = vmatpush.msra.mxu0 0.0
        %277 = vmatpush.msra.mxu0 0.0
        %278 = vmatpush.msra.mxu0 0.0
        %v279 = vand.u32 %v172, 4294901760
        %v280 = vsub.f32 %v172, %v279
        %281 = vmatpush.msra.mxu0 %v280
        %v282 = vand.u32 %v171, 4294901760
        %v283 = vsub.f32 %v171, %v282
        %284 = vmatpush.msra.mxu0 %v283
        %v285 = vand.u32 %v170, 4294901760
        %v286 = vsub.f32 %v170, %v285
        %287 = vmatpush.msra.mxu0 %v286
        %v288 = vand.u32 %v169, 4294901760
        %v289 = vsub.f32 %v169, %v288
        %290 = vmatpush.msra.mxu0 %v289
        %v291 = vand.u32 %v168, 4294901760
        %v292 = vsub.f32 %v168, %v291
        %293 = vmatpush.msra.mxu0 %v292
        %v294 = vand.u32 %v167, 4294901760
        %v295 = vsub.f32 %v167, %v294
        %296 = vmatpush.msra.mxu0 %v295
        %v297 = vand.u32 %v166, 4294901760
        %v298 = vsub.f32 %v166, %v297
        %299 = vmatpush.msra.mxu0 %v298
        %v300 = vand.u32 %v165, 4294901760
        %v301 = vsub.f32 %v165, %v300
        %302 = vmatpush.msra.mxu0 %v301
        %v303 = vand.u32 %v175, 4294901760
        %v304 = vsub.f32 %v175, %v303
        %305 = vmatmul.f32.gmra.mxu0 %v304
        %v306 = vpop.f32.mrf.mxu0
        %v307 = vadd.f32 %v269, %v306
        %308 = vdwg.mxu0
        %309 = vmatpush.msra.mxu0 0.0
        %310 = vmatpush.msra.mxu0 0.0
        %311 = vmatpush.msra.mxu0 0.0
        %312 = vmatpush.msra.mxu0 0.0
        %313 = vmatpush.msra.mxu0 0.0
        %314 = vmatpush.msra.mxu0 0.0
        %315 = vmatpush.msra.mxu0 0.0
        %316 = vmatpush.msra.mxu0 0.0
        %v317 = vand.u32 %v172, 4294901760
        %318 = vmatpush.msra.mxu0 %v317
        %v319 = vand.u32 %v171, 4294901760
        %320 = vmatpush.msra.mxu0 %v319
        %v321 = vand.u32 %v170, 4294901760
        %322 = vmatpush.msra.mxu0 %v321
        %v323 = vand.u32 %v169, 4294901760
        %324 = vmatpush.msra.mxu0 %v323
        %v325 = vand.u32 %v168, 4294901760
        %326 = vmatpush.msra.mxu0 %v325
        %v327 = vand.u32 %v167, 4294901760
        %328 = vmatpush.msra.mxu0 %v327
        %v329 = vand.u32 %v166, 4294901760
        %330 = vmatpush.msra.mxu0 %v329
        %v331 = vand.u32 %v165, 4294901760
        %332 = vmatpush.msra.mxu0 %v331
        %v333 = vand.u32 %v175, 4294901760
        %v334 = vsub.f32 %v175, %v333
        %v335 = vand.u32 %v334, 4294901760
        %336 = vmatmul.f32.gmra.mxu0 %v335
        %v337 = vpop.f32.mrf.mxu0
        %v338 = vadd.f32 %v307, %v337
        %339 = vdwg.mxu0
        %340 = vmatpush.msra.mxu0 0.0
        %341 = vmatpush.msra.mxu0 0.0
        %342 = vmatpush.msra.mxu0 0.0
        %343 = vmatpush.msra.mxu0 0.0
        %344 = vmatpush.msra.mxu0 0.0
        %345 = vmatpush.msra.mxu0 0.0
        %346 = vmatpush.msra.mxu0 0.0
        %347 = vmatpush.msra.mxu0 0.0
        %v348 = vand.u32 %v172, 4294901760
        %v349 = vsub.f32 %v172, %v348
        %v350 = vand.u32 %v349, 4294901760
        %351 = vmatpush.msra.mxu0 %v350
        %v352 = vand.u32 %v171, 4294901760
        %v353 = vsub.f32 %v171, %v352
        %v354 = vand.u32 %v353, 4294901760
        %355 = vmatpush.msra.mxu0 %v354
        %v356 = vand.u32 %v170, 4294901760
        %v357 = vsub.f32 %v170, %v356
        %v358 = vand.u32 %v357, 4294901760
        %359 = vmatpush.msra.mxu0 %v358
        %v360 = vand.u32 %v169, 4294901760
        %v361 = vsub.f32 %v169, %v360
        %v362 = vand.u32 %v361, 4294901760
        %363 = vmatpush.msra.mxu0 %v362
        %v364 = vand.u32 %v168, 4294901760
        %v365 = vsub.f32 %v168, %v364
        %v366 = vand.u32 %v365, 4294901760
        %367 = vmatpush.msra.mxu0 %v366
        %v368 = vand.u32 %v167, 4294901760
        %v369 = vsub.f32 %v167, %v368
        %v370 = vand.u32 %v369, 4294901760
        %371 = vmatpush.msra.mxu0 %v370
        %v372 = vand.u32 %v166, 4294901760
        %v373 = vsub.f32 %v166, %v372
        %v374 = vand.u32 %v373, 4294901760
        %375 = vmatpush.msra.mxu0 %v374
        %v376 = vand.u32 %v165, 4294901760
        %v377 = vsub.f32 %v165, %v376
        %v378 = vand.u32 %v377, 4294901760
        %379 = vmatpush.msra.mxu0 %v378
        %v380 = vand.u32 %v175, 4294901760
        %381 = vmatmul.f32.gmra.mxu0 %v380
        %v382 = vpop.f32.mrf.mxu0
        %v383 = vadd.f32 %v338, %v382
        %384 = vdwg.mxu0
        %385 = vmatpush.msra.mxu0 0.0
        %386 = vmatpush.msra.mxu0 0.0
        %387 = vmatpush.msra.mxu0 0.0
        %388 = vmatpush.msra.mxu0 0.0
        %389 = vmatpush.msra.mxu0 0.0
        %390 = vmatpush.msra.mxu0 0.0
        %391 = vmatpush.msra.mxu0 0.0
        %392 = vmatpush.msra.mxu0 0.0
        %v393 = vand.u32 %v172, 4294901760
        %394 = vmatpush.msra.mxu0 %v393
        %v395 = vand.u32 %v171, 4294901760
        %396 = vmatpush.msra.mxu0 %v395
        %v397 = vand.u32 %v170, 4294901760
        %398 = vmatpush.msra.mxu0 %v397
        %v399 = vand.u32 %v169, 4294901760
        %400 = vmatpush.msra.mxu0 %v399
        %v401 = vand.u32 %v168, 4294901760
        %402 = vmatpush.msra.mxu0 %v401
        %v403 = vand.u32 %v167, 4294901760
        %404 = vmatpush.msra.mxu0 %v403
        %v405 = vand.u32 %v166, 4294901760
        %406 = vmatpush.msra.mxu0 %v405
        %v407 = vand.u32 %v165, 4294901760
        %408 = vmatpush.msra.mxu0 %v407
        %v409 = vand.u32 %v175, 4294901760
        %410 = vmatmul.f32.gmra.mxu0 %v409
        %v411 = vpop.f32.mrf.mxu0
        %v412 = vadd.f32 %v383, %v411
        %413 = vdwg.mxu0
        %414 = vst [vmem:[%s151] sm:$0xff] %v412
        %s415 = sand.u32 %s72, 1
        %s416 = scalar_lea.sflag [#allocation4], %s415
        %s417 = sand.u32 %s72, 1
        %s418 = smul.addr %s417, 8
        %s419 = scalar_lea.vmem [#allocation5], %s418
        // Predicated region
        $region33: #{tpu_custom_call.1} parent=27 // pred_check
          %p420 = pneg %p82
        $region34: #{tpu_custom_call.1} parent=27 // pred_check_branch
          %422 = sbr.rel (%p420) target = $region36
        $region35: #{tpu_custom_call.1} parent=27 // pred_region
          %424 = vsyncadd %s416, 0
          %s425 = smul.addr %s17, 8
          %s426 = scalar_lea.hbm %s2, %s425
          %s428 = sshll.u32 %s419, 4
          %s429 = int_to_ptr.vmem [resolvable:$true] %s428
          %s430 = sshll.u32 %s426, 4
          %s431 = int_to_ptr.hbm [resolvable:$true] %s430
          %433 = dma.vmem_to_hbm [thread:$0]  %s429, 128, %s431, %s416
        $region36: #{tpu_custom_call.1} parent=27 // pred_fallthru
          _
      $region28: #{tpu_custom_call.1} parent=5 // pred_fallthru
        _
      %p434 = scmp.le.s32.totalorder 2, %s12
      // Predicated region
      $region37: #{tpu_custom_call.1} parent=5 // pred_check
        %p435 = pneg %p434
      $region38: #{tpu_custom_call.1} parent=5 // pred_check_branch
        %437 = sbr.rel (%p435) target = $region40
      $region39: #{tpu_custom_call.1} parent=5 // pred_region
        %s438 = ssub.s32 %s12, 2
        // Predicated region
        $region41: #{tpu_custom_call.1} parent=39 // pred_check
          %p439 = pneg %p88
        $region42: #{tpu_custom_call.1} parent=39 // pred_check_branch
          %441 = sbr.rel (%p439) target = $region44
        $region43: #{tpu_custom_call.1} parent=39 // pred_region
          %s442 = sand.u32 %s73, 1
          %s443 = scalar_lea.sflag [#allocation4], %s442
          %s444 = sand.u32 %s73, 1
          %s445 = smul.addr %s444, 8
          %s446 = scalar_lea.vmem [#allocation5], %s445
          %448 = dma.done %s443, 128
        $region44: #{tpu_custom_call.1} parent=39 // pred_fallthru
          _
      $region40: #{tpu_custom_call.1} parent=5 // pred_fallthru
        _
    $region6: #{tpu_custom_call.1} parent=1 // loop_footer
      %s16 = sadd.s32 1, %s12
    $region7: #{tpu_custom_call.1} parent=1 // loop_footer_branch
      %11 = sbr.rel target = $region3
    $region8: #{tpu_custom_call.1} parent=1 // loop_exit
      _
    %449 = vsyncpa [#allocation3], 1
    %s450 = scalar_lea.sflag [#allocation3], 1
    %451 = vsyncpa %s450, 1
    %452 = vsyncpa [#allocation4], 1
    %s453 = scalar_lea.sflag [#allocation4], 1
    %454 = vsyncpa %s453, 1

</llo_original>
